<compile_context>
chip_gen: v7x
topology: tpu7x:2x2x1
jax: 0.10.0
libtpu: 0.0.40
codegen_flags: <defaults>
</compile_context>

<pallas_src>
import functools

import jax
import jax.numpy as jnp
from jax.experimental import pallas as pl
from jax.experimental.pallas import tpu as pltpu


# ---------------------------------------------------------------------------
# Pallas kernel: one batch element per grid step, fully fused in VMEM.
# ---------------------------------------------------------------------------
def _mha_kernel(x_ref, w_ref, b_ref, o_ref, *, n_heads, dh):
    D = n_heads * dh

    x = x_ref[0].astype(jnp.bfloat16)                       # (S, D)  cast once per step

    # Fused QKV projection on the MXU, f32 accumulation.  Scale already folded into W_q/b_q.
    qkv = jnp.dot(x, w_ref[...], preferred_element_type=jnp.float32) + b_ref[...]   # (S, 3D)

    q = qkv[:, 0 * D:1 * D]                                  # lane-aligned 128-wide slices
    k = qkv[:, 1 * D:2 * D]
    v = qkv[:, 2 * D:3 * D]

    ctxs = []
    for h in range(n_heads):                                 # small static head loop
        sl = slice(h * dh, (h + 1) * dh)
        qh = q[:, sl].astype(jnp.bfloat16)                   # (S, dh)
        kh = k[:, sl].astype(jnp.bfloat16)
        vh = v[:, sl].astype(jnp.bfloat16)

        # q @ k^T without an explicit transpose; logits / softmax stats stay in f32
        # (v5e VPU/EUP have no bf16 path).
        logits = jax.lax.dot_general(
            qh, kh, (((1,), (1,)), ((), ())), preferred_element_type=jnp.float32)   # (S, S)
        logits = logits - jnp.max(logits, axis=-1, keepdims=True)
        p = jnp.exp(logits)
        denom = jnp.sum(p, axis=-1, keepdims=True)
        attn = p * pl.reciprocal(denom, approx=True)         # EUP slot instead of VALU divide

        ctxs.append(jnp.dot(attn.astype(jnp.bfloat16), vh,
                            preferred_element_type=jnp.float32))                    # (S, dh)

    # 'b h n d -> b n (h d)' concat done in-register; single lane-dense (S, D) store.
    o_ref[0] = jnp.concatenate(ctxs, axis=-1).astype(o_ref.dtype)


# ---------------------------------------------------------------------------
# Wrapper: fused lane-dense weight layout, grid=(B,), no post-kernel layout glue.
# ---------------------------------------------------------------------------
def multi_head_attention(x, w_q, b_q, w_k, b_k, w_v, b_v, *, n_heads):
    """x: (B, S, D) f32; w_*: (D, D) with output features on axis 1; b_*: (D,)."""
    B, S, D = x.shape
    assert D % n_heads == 0
    dh = D // n_heads
    scale = dh ** -0.5

    # One-time static weight prep (outside the hot path):
    #  * fold 1/sqrt(dh) into W_q / b_q before the bf16 cast,
    #  * concatenate Q/K/V along the output axis -> lane-dense (D, 3D) bf16 block,
    #  * biases as a single (1, 3D) f32 row.
    w_qkv = jnp.concatenate([w_q * scale, w_k, w_v], axis=1).astype(jnp.bfloat16)   # (D, 3D)
    b_qkv = jnp.concatenate([b_q * scale, b_k, b_v], axis=0).reshape(1, 3 * D)      # (1, 3D) f32
    b_qkv = b_qkv.astype(jnp.float32)

    x_spec = pl.BlockSpec((1, S, D), lambda b: (b, 0, 0))
    w_spec = pl.BlockSpec((D, 3 * D), lambda b: (0, 0))      # resident; not re-DMA'd per step
    b_spec = pl.BlockSpec((1, 3 * D), lambda b: (0, 0))
    o_spec = pl.BlockSpec((1, S, D), lambda b: (b, 0, 0))    # lane-dense (S, 128) slab

    flops = (2 * B * S * D * (3 * D)            # fused QKV projection
             + 2 * B * n_heads * S * S * dh * 2)  # q k^T + attn @ v
    transcendentals = B * n_heads * S * (S + 1)   # exp + approx reciprocal
    bytes_accessed = (4 * x.size                 # x (f32 in)
                      + 2 * 3 * D * D            # W_qkv (bf16)
                      + 4 * 3 * D                # bias (f32)
                      + 4 * B * S * D)           # output (f32)

    out = pl.pallas_call(
        functools.partial(_mha_kernel, n_heads=n_heads, dh=dh),
        out_shape=jax.ShapeDtypeStruct((B, S, D), x.dtype),
        grid=(B,),
        in_specs=[x_spec, w_spec, b_spec],
        out_specs=o_spec,
        compiler_params=pltpu.CompilerParams(
            dimension_semantics=("parallel",)),
        cost_estimate=pl.CostEstimate(flops=flops,
                                      transcendentals=transcendentals,
                                      bytes_accessed=bytes_accessed),
    )(x, w_qkv, b_qkv)

    return out
    # TODO(synk): for long sequences (real model scale) add a query-tile grid axis and a
    # flash-style online softmax instead of holding the full (S, S) logits in VMEM; size the
    # Q/K/V tiles against v7x's 64 MiB VMEM (not v6e's 128 MiB) and use 256-multiple M/N blocks.


# ---------------------------------------------------------------------------
# Pure-JAX reference (mirrors the PyTorch module exactly, in f32).
# ---------------------------------------------------------------------------
def mha_reference(x, w_q, b_q, w_k, b_k, w_v, b_v, n_heads):
    B, S, D = x.shape
    dh = D // n_heads
    q = x @ w_q + b_q
    k = x @ w_k + b_k
    v = x @ w_v + b_v

    def split(t):                                              # 'b n (h d) -> b h n d'
        return jnp.transpose(t.reshape(B, S, n_heads, dh), (0, 2, 1, 3))

    qh, kh, vh = split(q), split(k), split(v)
    logits = jnp.einsum("bhqd,bhkd->bhqk", qh, kh) * dh ** -0.5
    attn = jax.nn.softmax(logits, axis=-1)
    out = jnp.einsum("bhqk,bhkd->bhqd", attn, vh)
    return jnp.transpose(out, (0, 2, 1, 3)).reshape(B, S, D)   # 'b h n d -> b n (h d)'


# ---------------------------------------------------------------------------
if __name__ == "__main__":
    B, S, D, H = 2, 16, 128, 4   # batch, n_patches + 1, dim (lane-dense), n_heads

    key = jax.random.PRNGKey(0)
    kx, kwq, kwk, kwv, kbq, kbk, kbv = jax.random.split(key, 7)

    def init(k, shape, s):
        return (s * jax.random.normal(k, shape)).astype(jnp.float32)

    x = jax.random.normal(kx, (B, S, D), dtype=jnp.float32)
    s_w = 1.0 / (D ** 0.5)
    w_q = init(kwq, (D, D), s_w)
    w_k = init(kwk, (D, D), s_w)
    w_v = init(kwv, (D, D), s_w)
    b_q = init(kbq, (D,), 0.1)
    b_k = init(kbk, (D,), 0.1)
    b_v = init(kbv, (D,), 0.1)

    out = multi_head_attention(x, w_q, b_q, w_k, b_k, w_v, b_v, n_heads=H)
    out = jax.block_until_ready(out)

    assert out.shape == (B, S, D), out.shape
    assert bool(jnp.isfinite(out).all())

    ref = mha_reference(x, w_q, b_q, w_k, b_k, w_v, b_v, H)
    max_err = float(jnp.max(jnp.abs(out - ref)))
    # bf16 MXU operands + approx reciprocal => small deviation vs the pure-f32 reference.
    assert max_err < 2e-1, max_err

    print("KERNEL_OK")
</pallas_src>

<mosaic_0001>
module attributes {stable_mosaic.version = 11 : i64} {
  func.func @_mha_kernel(%arg0: i32, %arg1: memref<1x16x128xf32, #tpu.memory_space<vmem>>, %arg2: memref<128x384xbf16, #tpu.memory_space<vmem>>, %arg3: memref<1x384xf32, #tpu.memory_space<vmem>>, %arg4: memref<1x16x128xf32, #tpu.memory_space<vmem>>) attributes {dimension_semantics = [#tpu.dimension_semantics<parallel>], iteration_bounds = array<i64: 2>, scalar_prefetch = 0 : i64, scratch_operands = 0 : i64, tpu.core_type = #tpu.core_type<tc>, window_params = [{transform_indices = @transform_0, window_bounds = array<i64: 1, 16, 128>}, {pipeline_mode = #tpu.pipeline_mode<synchronous>, transform_indices = @transform_1, window_bounds = array<i64: 128, 384>}, {pipeline_mode = #tpu.pipeline_mode<synchronous>, transform_indices = @transform_2, window_bounds = array<i64: 1, 384>}, {transform_indices = @transform_3, window_bounds = array<i64: 1, 16, 128>}]} {
    %c0 = arith.constant 0 : index
    %c0_0 = arith.constant 0 : index
    %c0_1 = arith.constant 0 : index
    %0 = vector.load %arg1[%c0, %c0_0, %c0_1] : memref<1x16x128xf32, #tpu.memory_space<vmem>>, vector<1x16x128xf32>
    %1 = vector.shape_cast %0 : vector<1x16x128xf32> to vector<16x128xf32>
    %2 = arith.truncf %1 : vector<16x128xf32> to vector<16x128xbf16>
    %c0_2 = arith.constant 0 : index
    %c0_3 = arith.constant 0 : index
    %3 = vector.load %arg2[%c0_2, %c0_3] : memref<128x384xbf16, #tpu.memory_space<vmem>>, vector<128x384xbf16>
    %cst = arith.constant dense<0.000000e+00> : vector<16x384xf32>
    %4 = tpu.matmul %2, %3, %cst {dimension_numbers = #tpu.dot_dimension_numbers<[1], [0], [0], [1], [0, 0, 1, 1], [], []>} : vector<16x128xbf16>, vector<128x384xbf16>, vector<16x384xf32> -> vector<16x384xf32>
    %c0_4 = arith.constant 0 : index
    %c0_5 = arith.constant 0 : index
    %5 = vector.load %arg3[%c0_4, %c0_5] : memref<1x384xf32, #tpu.memory_space<vmem>>, vector<1x384xf32>
    %6 = vector.broadcast %5 : vector<1x384xf32> to vector<16x384xf32>
    %7 = arith.addf %4, %6 : vector<16x384xf32>
    %8 = vector.extract_strided_slice %7 {offsets = [0, 0], sizes = [16, 128], strides = [1, 1]} : vector<16x384xf32> to vector<16x128xf32>
    %9 = vector.extract_strided_slice %7 {offsets = [0, 128], sizes = [16, 128], strides = [1, 1]} : vector<16x384xf32> to vector<16x128xf32>
    %10 = vector.extract_strided_slice %7 {offsets = [0, 256], sizes = [16, 128], strides = [1, 1]} : vector<16x384xf32> to vector<16x128xf32>
    %11 = vector.extract_strided_slice %8 {offsets = [0, 0], sizes = [16, 32], strides = [1, 1]} : vector<16x128xf32> to vector<16x32xf32>
    %12 = arith.truncf %11 : vector<16x32xf32> to vector<16x32xbf16>
    %13 = vector.extract_strided_slice %9 {offsets = [0, 0], sizes = [16, 32], strides = [1, 1]} : vector<16x128xf32> to vector<16x32xf32>
    %14 = arith.truncf %13 : vector<16x32xf32> to vector<16x32xbf16>
    %15 = vector.extract_strided_slice %10 {offsets = [0, 0], sizes = [16, 32], strides = [1, 1]} : vector<16x128xf32> to vector<16x32xf32>
    %16 = arith.truncf %15 : vector<16x32xf32> to vector<16x32xbf16>
    %cst_6 = arith.constant dense<0.000000e+00> : vector<16x16xf32>
    %17 = tpu.matmul %12, %14, %cst_6 {dimension_numbers = #tpu.dot_dimension_numbers<[1], [1], [0], [0], [0, 0, 1, 0], [], []>} : vector<16x32xbf16>, vector<16x32xbf16>, vector<16x16xf32> -> vector<16x16xf32>
    %cst_7 = arith.constant dense<0xFF800000> : vector<16xf32>
    %18 = vector.multi_reduction <maximumf>, %17, %cst_7 [1] : vector<16x16xf32> to vector<16xf32>
    %19 = vector.shape_cast %18 : vector<16xf32> to vector<16x1xf32>
    %20 = vector.broadcast %19 : vector<16x1xf32> to vector<16x16xf32>
    %21 = arith.subf %17, %20 : vector<16x16xf32>
    %22 = math.exp %21 : vector<16x16xf32>
    %cst_8 = arith.constant dense<0.000000e+00> : vector<16xf32>
    %23 = vector.multi_reduction <add>, %22, %cst_8 [1] : vector<16x16xf32> to vector<16xf32>
    %24 = vector.shape_cast %23 : vector<16xf32> to vector<16x1xf32>
    %25 = tpu.reciprocal %24 {approx = true} : vector<16x1xf32> -> vector<16x1xf32>
    %26 = vector.broadcast %25 : vector<16x1xf32> to vector<16x16xf32>
    %27 = arith.mulf %22, %26 : vector<16x16xf32>
    %28 = arith.truncf %27 : vector<16x16xf32> to vector<16x16xbf16>
    %cst_9 = arith.constant dense<0.000000e+00> : vector<16x32xf32>
    %29 = tpu.matmul %28, %16, %cst_9 {dimension_numbers = #tpu.dot_dimension_numbers<[1], [0], [0], [1], [0, 0, 1, 1], [], []>} : vector<16x16xbf16>, vector<16x32xbf16>, vector<16x32xf32> -> vector<16x32xf32>
    %30 = vector.extract_strided_slice %8 {offsets = [0, 32], sizes = [16, 32], strides = [1, 1]} : vector<16x128xf32> to vector<16x32xf32>
    %31 = arith.truncf %30 : vector<16x32xf32> to vector<16x32xbf16>
    %32 = vector.extract_strided_slice %9 {offsets = [0, 32], sizes = [16, 32], strides = [1, 1]} : vector<16x128xf32> to vector<16x32xf32>
    %33 = arith.truncf %32 : vector<16x32xf32> to vector<16x32xbf16>
    %34 = vector.extract_strided_slice %10 {offsets = [0, 32], sizes = [16, 32], strides = [1, 1]} : vector<16x128xf32> to vector<16x32xf32>
    %35 = arith.truncf %34 : vector<16x32xf32> to vector<16x32xbf16>
    %cst_10 = arith.constant dense<0.000000e+00> : vector<16x16xf32>
    %36 = tpu.matmul %31, %33, %cst_10 {dimension_numbers = #tpu.dot_dimension_numbers<[1], [1], [0], [0], [0, 0, 1, 0], [], []>} : vector<16x32xbf16>, vector<16x32xbf16>, vector<16x16xf32> -> vector<16x16xf32>
    %cst_11 = arith.constant dense<0xFF800000> : vector<16xf32>
    %37 = vector.multi_reduction <maximumf>, %36, %cst_11 [1] : vector<16x16xf32> to vector<16xf32>
    %38 = vector.shape_cast %37 : vector<16xf32> to vector<16x1xf32>
    %39 = vector.broadcast %38 : vector<16x1xf32> to vector<16x16xf32>
    %40 = arith.subf %36, %39 : vector<16x16xf32>
    %41 = math.exp %40 : vector<16x16xf32>
    %cst_12 = arith.constant dense<0.000000e+00> : vector<16xf32>
    %42 = vector.multi_reduction <add>, %41, %cst_12 [1] : vector<16x16xf32> to vector<16xf32>
    %43 = vector.shape_cast %42 : vector<16xf32> to vector<16x1xf32>
    %44 = tpu.reciprocal %43 {approx = true} : vector<16x1xf32> -> vector<16x1xf32>
    %45 = vector.broadcast %44 : vector<16x1xf32> to vector<16x16xf32>
    %46 = arith.mulf %41, %45 : vector<16x16xf32>
    %47 = arith.truncf %46 : vector<16x16xf32> to vector<16x16xbf16>
    %cst_13 = arith.constant dense<0.000000e+00> : vector<16x32xf32>
    %48 = tpu.matmul %47, %35, %cst_13 {dimension_numbers = #tpu.dot_dimension_numbers<[1], [0], [0], [1], [0, 0, 1, 1], [], []>} : vector<16x16xbf16>, vector<16x32xbf16>, vector<16x32xf32> -> vector<16x32xf32>
    %49 = vector.extract_strided_slice %8 {offsets = [0, 64], sizes = [16, 32], strides = [1, 1]} : vector<16x128xf32> to vector<16x32xf32>
    %50 = arith.truncf %49 : vector<16x32xf32> to vector<16x32xbf16>
    %51 = vector.extract_strided_slice %9 {offsets = [0, 64], sizes = [16, 32], strides = [1, 1]} : vector<16x128xf32> to vector<16x32xf32>
    %52 = arith.truncf %51 : vector<16x32xf32> to vector<16x32xbf16>
    %53 = vector.extract_strided_slice %10 {offsets = [0, 64], sizes = [16, 32], strides = [1, 1]} : vector<16x128xf32> to vector<16x32xf32>
    %54 = arith.truncf %53 : vector<16x32xf32> to vector<16x32xbf16>
    %cst_14 = arith.constant dense<0.000000e+00> : vector<16x16xf32>
    %55 = tpu.matmul %50, %52, %cst_14 {dimension_numbers = #tpu.dot_dimension_numbers<[1], [1], [0], [0], [0, 0, 1, 0], [], []>} : vector<16x32xbf16>, vector<16x32xbf16>, vector<16x16xf32> -> vector<16x16xf32>
    %cst_15 = arith.constant dense<0xFF800000> : vector<16xf32>
    %56 = vector.multi_reduction <maximumf>, %55, %cst_15 [1] : vector<16x16xf32> to vector<16xf32>
    %57 = vector.shape_cast %56 : vector<16xf32> to vector<16x1xf32>
    %58 = vector.broadcast %57 : vector<16x1xf32> to vector<16x16xf32>
    %59 = arith.subf %55, %58 : vector<16x16xf32>
    %60 = math.exp %59 : vector<16x16xf32>
    %cst_16 = arith.constant dense<0.000000e+00> : vector<16xf32>
    %61 = vector.multi_reduction <add>, %60, %cst_16 [1] : vector<16x16xf32> to vector<16xf32>
    %62 = vector.shape_cast %61 : vector<16xf32> to vector<16x1xf32>
    %63 = tpu.reciprocal %62 {approx = true} : vector<16x1xf32> -> vector<16x1xf32>
    %64 = vector.broadcast %63 : vector<16x1xf32> to vector<16x16xf32>
    %65 = arith.mulf %60, %64 : vector<16x16xf32>
    %66 = arith.truncf %65 : vector<16x16xf32> to vector<16x16xbf16>
    %cst_17 = arith.constant dense<0.000000e+00> : vector<16x32xf32>
    %67 = tpu.matmul %66, %54, %cst_17 {dimension_numbers = #tpu.dot_dimension_numbers<[1], [0], [0], [1], [0, 0, 1, 1], [], []>} : vector<16x16xbf16>, vector<16x32xbf16>, vector<16x32xf32> -> vector<16x32xf32>
    %68 = vector.extract_strided_slice %8 {offsets = [0, 96], sizes = [16, 32], strides = [1, 1]} : vector<16x128xf32> to vector<16x32xf32>
    %69 = arith.truncf %68 : vector<16x32xf32> to vector<16x32xbf16>
    %70 = vector.extract_strided_slice %9 {offsets = [0, 96], sizes = [16, 32], strides = [1, 1]} : vector<16x128xf32> to vector<16x32xf32>
    %71 = arith.truncf %70 : vector<16x32xf32> to vector<16x32xbf16>
    %72 = vector.extract_strided_slice %10 {offsets = [0, 96], sizes = [16, 32], strides = [1, 1]} : vector<16x128xf32> to vector<16x32xf32>
    %73 = arith.truncf %72 : vector<16x32xf32> to vector<16x32xbf16>
    %cst_18 = arith.constant dense<0.000000e+00> : vector<16x16xf32>
    %74 = tpu.matmul %69, %71, %cst_18 {dimension_numbers = #tpu.dot_dimension_numbers<[1], [1], [0], [0], [0, 0, 1, 0], [], []>} : vector<16x32xbf16>, vector<16x32xbf16>, vector<16x16xf32> -> vector<16x16xf32>
    %cst_19 = arith.constant dense<0xFF800000> : vector<16xf32>
    %75 = vector.multi_reduction <maximumf>, %74, %cst_19 [1] : vector<16x16xf32> to vector<16xf32>
    %76 = vector.shape_cast %75 : vector<16xf32> to vector<16x1xf32>
    %77 = vector.broadcast %76 : vector<16x1xf32> to vector<16x16xf32>
    %78 = arith.subf %74, %77 : vector<16x16xf32>
    %79 = math.exp %78 : vector<16x16xf32>
    %cst_20 = arith.constant dense<0.000000e+00> : vector<16xf32>
    %80 = vector.multi_reduction <add>, %79, %cst_20 [1] : vector<16x16xf32> to vector<16xf32>
    %81 = vector.shape_cast %80 : vector<16xf32> to vector<16x1xf32>
    %82 = tpu.reciprocal %81 {approx = true} : vector<16x1xf32> -> vector<16x1xf32>
    %83 = vector.broadcast %82 : vector<16x1xf32> to vector<16x16xf32>
    %84 = arith.mulf %79, %83 : vector<16x16xf32>
    %85 = arith.truncf %84 : vector<16x16xf32> to vector<16x16xbf16>
    %cst_21 = arith.constant dense<0.000000e+00> : vector<16x32xf32>
    %86 = tpu.matmul %85, %73, %cst_21 {dimension_numbers = #tpu.dot_dimension_numbers<[1], [0], [0], [1], [0, 0, 1, 1], [], []>} : vector<16x16xbf16>, vector<16x32xbf16>, vector<16x32xf32> -> vector<16x32xf32>
    %87 = tpu.concatenate %29, %48, %67, %86 in 1 : vector<16x32xf32>, vector<16x32xf32>, vector<16x32xf32>, vector<16x32xf32> -> vector<16x128xf32>
    %c0_22 = arith.constant 0 : index
    %c0_23 = arith.constant 0 : index
    %c0_24 = arith.constant 0 : index
    %88 = vector.load %arg4[%c0_22, %c0_23, %c0_24] : memref<1x16x128xf32, #tpu.memory_space<vmem>>, vector<1x16x128xf32>
    %89 = vector.shape_cast %88 : vector<1x16x128xf32> to vector<16x128xf32>
    %90 = vector.shape_cast %87 : vector<16x128xf32> to vector<1x16x128xf32>
    tpu.vector_store %arg4[%c0_22, %c0_23, %c0_24], %90 {strides = array<i32>} : memref<1x16x128xf32, #tpu.memory_space<vmem>>, vector<1x16x128xf32>,
    return
  }
  func.func @transform_0(%arg0: i32) -> (i32, i32, i32) {
    %c0_i32 = arith.constant 0 : i32
    %c0_i32_0 = arith.constant 0 : i32
    %c0_i32_1 = arith.constant 0 : i32
    return %arg0, %c0_i32, %c0_i32_0 : i32, i32, i32
  }
  func.func @transform_1(%arg0: i32) -> (i32, i32) {
    %c0_i32 = arith.constant 0 : i32
    %c0_i32_0 = arith.constant 0 : i32
    %c0_i32_1 = arith.constant 0 : i32
    return %c0_i32, %c0_i32_0 : i32, i32
  }
  func.func @transform_2(%arg0: i32) -> (i32, i32) {
    %c0_i32 = arith.constant 0 : i32
    %c0_i32_0 = arith.constant 0 : i32
    %c0_i32_1 = arith.constant 0 : i32
    return %c0_i32, %c0_i32_0 : i32, i32
  }
  func.func @transform_3(%arg0: i32) -> (i32, i32, i32) {
    %c0_i32 = arith.constant 0 : i32
    %c0_i32_0 = arith.constant 0 : i32
    %c0_i32_1 = arith.constant 0 : i32
    return %arg0, %c0_i32, %c0_i32_0 : i32, i32, i32
  }
}

</mosaic_0001>

<llo_original>
// kernel: tpu_custom_call.1
$region0: #{tpu_custom_call.1}
  #allocation0 [shape = 'u32[]', space=smem, size = 0x4, offset = 0x4, fixed_abs, tag = 'smem constant byte address 0x4 - core index']
  #allocation1 [shape = 'u32[144,128]{1,0:T(1,128)}', space=vmem, size = 0x12000, scoped, tag = 'internal scratch']
  %s0 = inlined_call_operand.hbm [shape: f32[2,16,128], index: 0, kind: input, shape index: {}]
  %s1 = inlined_call_operand.hbm [shape: bf16[128,384], index: 1, kind: input, shape index: {}]
  %s2 = inlined_call_operand.vmem [shape: f32[1,384], index: 2, kind: input, shape index: {}]
  %s3 = inlined_call_operand.hbm [shape: f32[2,16,128], index: 3, kind: output, shape index: {}]
  %s4 = sld [smem:[#allocation0]]
  $region53: #{tpu_custom_call.1} parent=0
    _
  %s6 = ssub.s32 1, %s4
  %s7 = scalar_select 0, %s6, %s4
  $region1: #{tpu_custom_call.1} parent=0
    #allocation2 [shape = 'u8[16384]{0}', space=vmem, size = 0x4000, scoped, tag = 'input window, operand 0']
    #allocation3 [shape = 's32[2]{0}', space=sflag, size = 0x8, scoped, tag = 'scoped memory for tpu_custom_call.1']
    #allocation4 [shape = 's32[2]{0}', space=sflag, size = 0x8, scoped, tag = 'scoped memory for tpu_custom_call.1']
    #allocation5 [shape = 'u8[98304]{0}', space=vmem, size = 0x18000, scoped, tag = 'input window, operand 1, single buffered']
    #allocation6 [shape = 's32[1]{0}', space=sflag, size = 0x4, scoped, tag = 'scoped memory for tpu_custom_call.1']
    #allocation7 [shape = 'u8[16384]{0}', space=vmem, size = 0x4000, scoped, tag = 'output window, operand 0']
    %8 = vsyncpa [#allocation3], 0
    %s9 = scalar_lea.sflag [#allocation3], 1
    %10 = vsyncpa %s9, 0
    %11 = vsyncpa [#allocation6], 0
    %12 = vsyncpa [#allocation4], 0
    %s13 = scalar_lea.sflag [#allocation4], 1
    %14 = vsyncpa %s13, 0
    loop: start=0, step=1, limit=4
    $region2: #{tpu_custom_call.1} parent=1 // loop_pre_header
      _
    $region3: #{tpu_custom_call.1} parent=1 // loop_header
      %s16 = sphi 0, %s20
      %p17 = scmp.ge.s32.totalorder %s16, 4
      %s26 = sphi 0, %s28
      %s29 = sphi 0, %s26
      %s30 = sphi 0, %s29
      %s46 = sphi 0, %s30
      %s50 = sphi 0, %s50
      %s52 = sphi 0, %s50
      %s53 = sphi 0, %s52
      %s67 = sphi 0, %s53
      %s71 = sphi 0, %s71
      %s73 = sphi 0, %s71
      %s74 = sphi 0, %s73
      %s88 = sphi 0, %s74
      %s94 = sphi 0, %s96
      %s97 = sphi 0, %s94
      %s98 = sphi 0, %s97
      %s114 = sphi 0, %s98
    $region4: #{tpu_custom_call.1} parent=1 // loop_header_branch
      %19 = sbr.rel (%p17) target = $region8
    $region5: #{tpu_custom_call.1} parent=1 // loop_body
      %s21 = ssub.s32 %s16, 1
      %s22 = ssub.s32 %s16, 2
      %s23 = sadd.s32 %s16, 1
      %s24 = ssub.s32 %s16, %s23
      %p25 = scmp.eq.s32.totalorder %s24, 0
      %s27 = sadd.s32 %s26, 1
      %s28 = scalar_select %p25, %s26, %s27
      %p31 = pneg %p25
      %p32 = scmp.eq.s32.totalorder %s16, 1
      %p33 = por %p31, %p32
      %p34 = scmp.ne.s32.totalorder %s26, %s29
      %p35 = scmp.eq.s32.totalorder %s16, 0
      %p36 = por %p34, %p35
      %p37 = scmp.ne.s32.totalorder %s26, %s29
      %p38 = scmp.eq.s32.totalorder %s21, 1
      %p39 = por %p37, %p38
      %p40 = scmp.ne.s32.totalorder %s29, %s30
      %p41 = scmp.eq.s32.totalorder %s21, 0
      %p42 = por %p40, %p41
      %p43 = scmp.ne.s32.totalorder %s29, %s30
      %p44 = scmp.eq.s32.totalorder %s22, 1
      %p45 = por %p43, %p44
      %p47 = scmp.ne.s32.totalorder %s30, %s46
      %p48 = scmp.eq.s32.totalorder %s22, 0
      %p49 = por %p47, %p48
      %s51 = sadd.s32 %s50, 1
      %p54 = scmp.eq.s32.totalorder %s16, 1
      %p55 = scmp.ne.s32.totalorder %s50, %s52
      %p56 = scmp.eq.s32.totalorder %s16, 0
      %p57 = por %p55, %p56
      %p58 = scmp.ne.s32.totalorder %s50, %s52
      %p59 = scmp.eq.s32.totalorder %s21, 1
      %p60 = por %p58, %p59
      %p61 = scmp.ne.s32.totalorder %s52, %s53
      %p62 = scmp.eq.s32.totalorder %s21, 0
      %p63 = por %p61, %p62
      %p64 = scmp.ne.s32.totalorder %s52, %s53
      %p65 = scmp.eq.s32.totalorder %s22, 1
      %p66 = por %p64, %p65
      %p68 = scmp.ne.s32.totalorder %s53, %s67
      %p69 = scmp.eq.s32.totalorder %s22, 0
      %p70 = por %p68, %p69
      %s72 = sadd.s32 %s71, 1
      %p75 = scmp.eq.s32.totalorder %s16, 1
      %p76 = scmp.ne.s32.totalorder %s71, %s73
      %p77 = scmp.eq.s32.totalorder %s16, 0
      %p78 = por %p76, %p77
      %p79 = scmp.ne.s32.totalorder %s71, %s73
      %p80 = scmp.eq.s32.totalorder %s21, 1
      %p81 = por %p79, %p80
      %p82 = scmp.ne.s32.totalorder %s73, %s74
      %p83 = scmp.eq.s32.totalorder %s21, 0
      %p84 = por %p82, %p83
      %p85 = scmp.ne.s32.totalorder %s73, %s74
      %p86 = scmp.eq.s32.totalorder %s22, 1
      %p87 = por %p85, %p86
      %p89 = scmp.ne.s32.totalorder %s74, %s88
      %p90 = scmp.eq.s32.totalorder %s22, 0
      %p91 = por %p89, %p90
      %s92 = ssub.s32 %s16, %s23
      %p93 = scmp.eq.s32.totalorder %s92, 0
      %s95 = sadd.s32 %s94, 1
      %s96 = scalar_select %p93, %s94, %s95
      %p99 = pneg %p93
      %p100 = scmp.eq.s32.totalorder %s16, 1
      %p101 = por %p99, %p100
      %p102 = scmp.ne.s32.totalorder %s94, %s97
      %p103 = scmp.eq.s32.totalorder %s16, 0
      %p104 = por %p102, %p103
      %p105 = scmp.ne.s32.totalorder %s94, %s97
      %p106 = scmp.eq.s32.totalorder %s21, 1
      %p107 = por %p105, %p106
      %p108 = scmp.ne.s32.totalorder %s97, %s98
      %p109 = scmp.eq.s32.totalorder %s21, 0
      %p110 = por %p108, %p109
      %p111 = scmp.ne.s32.totalorder %s97, %s98
      %p112 = scmp.eq.s32.totalorder %s22, 1
      %p113 = por %p111, %p112
      %p115 = scmp.ne.s32.totalorder %s98, %s114
      %p116 = scmp.eq.s32.totalorder %s22, 0
      %p117 = por %p115, %p116
      %p118 = scmp.le.s32.totalorder 1, %s16
      %p119 = scmp.lt.s32.totalorder %s16, 3
      %p120 = pnand %p118, %p119
      %p121 = pneg %p120
      // Predicated region
      $region9: #{tpu_custom_call.1} parent=5 // pred_check
        _
      $region10: #{tpu_custom_call.1} parent=5 // pred_check_branch
        %123 = sbr.rel (%p120) target = $region12
      $region11: #{tpu_custom_call.1} parent=5 // pred_region
        %s124 = ssub.s32 %s16, 1
        // Predicated region
        $region13: #{tpu_custom_call.1} parent=11 // pred_check
          %p125 = pneg %p63
        $region14: #{tpu_custom_call.1} parent=11 // pred_check_branch
          %127 = sbr.rel (%p125) target = $region16
        $region15: #{tpu_custom_call.1} parent=11 // pred_region
          %s129 = ssub.s32 3072, 3072
          %130 = vsyncadd [#allocation6], %s129
          %s131 = sshll.u32 [#allocation5], 4
          %s132 = int_to_ptr.vmem [resolvable:$true] %s131
          %137 = dma.hbm_to_vmem [thread:$0]  %s1, 3072, %s132, [#allocation6], 192, 192, 12
        $region16: #{tpu_custom_call.1} parent=11 // pred_fallthru
          _
        // Predicated region
        $region17: #{tpu_custom_call.1} parent=11 // pred_check
          %p138 = pneg %p84
        $region18: #{tpu_custom_call.1} parent=11 // pred_check_branch
          %140 = sbr.rel (%p138) target = $region20
        $region19: #{tpu_custom_call.1} parent=11 // pred_region
          _
        $region20: #{tpu_custom_call.1} parent=11 // pred_fallthru
          _
      $region12: #{tpu_custom_call.1} parent=5 // pred_fallthru
        _
      %p141 = scmp.lt.s32.totalorder %s16, 2
      // Predicated region
      $region21: #{tpu_custom_call.1} parent=5 // pred_check
        %p142 = pneg %p141
      $region22: #{tpu_custom_call.1} parent=5 // pred_check_branch
        %144 = sbr.rel (%p142) target = $region24
      $region23: #{tpu_custom_call.1} parent=5 // pred_region
        // Predicated region
        $region25: #{tpu_custom_call.1} parent=23 // pred_check
          %p145 = pneg %p36
        $region26: #{tpu_custom_call.1} parent=23 // pred_check_branch
          %147 = sbr.rel (%p145) target = $region28
        $region27: #{tpu_custom_call.1} parent=23 // pred_region
          %s148 = sand.u32 %s26, 1
          %s149 = scalar_lea.sflag [#allocation3], %s148
          %s150 = sand.u32 %s26, 1
          %s151 = smul.addr %s150, 16
          %s152 = scalar_lea.vmem [#allocation2], %s151
          %s154 = ssub.s32 256, 256
          %155 = vsyncadd %s149, %s154
          %s156 = smul.addr %s16, 2
          %s157 = smul.addr %s156, 128
          %s158 = scalar_lea.hbm %s0, %s157
          %s159 = sshll.u32 %s152, 4
          %s160 = int_to_ptr.vmem [resolvable:$true] %s159
          %165 = dma.hbm_to_vmem [thread:$0]  %s158, 256, %s160, %s149, 128, 128, 8
        $region28: #{tpu_custom_call.1} parent=23 // pred_fallthru
          _
      $region24: #{tpu_custom_call.1} parent=5 // pred_fallthru
        _
      %p166 = scmp.le.s32.totalorder 1, %s16
      %p167 = scmp.lt.s32.totalorder %s16, 3
      %p168 = pnand %p166, %p167
      %p169 = pneg %p168
      // Predicated region
      $region29: #{tpu_custom_call.1} parent=5 // pred_check
        _
      $region30: #{tpu_custom_call.1} parent=5 // pred_check_branch
        %171 = sbr.rel (%p168) target = $region32
      $region31: #{tpu_custom_call.1} parent=5 // pred_region
        %s172 = ssub.s32 %s16, 1
        %s173 = sand.u32 %s29, 1
        %s174 = scalar_lea.sflag [#allocation3], %s173
        %s175 = sand.u32 %s29, 1
        %s176 = smul.addr %s175, 16
        %s177 = scalar_lea.vmem [#allocation2], %s176
        // Predicated region
        $region33: #{tpu_custom_call.1} parent=31 // pred_check
          %p178 = pneg %p42
        $region34: #{tpu_custom_call.1} parent=31 // pred_check_branch
          %180 = sbr.rel (%p178) target = $region36
        $region35: #{tpu_custom_call.1} parent=31 // pred_region
          %181 = dma.done %s174, 256
        $region36: #{tpu_custom_call.1} parent=31 // pred_fallthru
          _
        // Predicated region
        $region37: #{tpu_custom_call.1} parent=31 // pred_check
          %p182 = pneg %p63
        $region38: #{tpu_custom_call.1} parent=31 // pred_check_branch
          %184 = sbr.rel (%p182) target = $region40
        $region39: #{tpu_custom_call.1} parent=31 // pred_region
          %185 = dma.done [#allocation6], 3072
        $region40: #{tpu_custom_call.1} parent=31 // pred_fallthru
          _
        %s186 = sand.u32 %s29, 1
        %s187 = scalar_lea.sflag [#allocation3], %s186
        %s188 = sand.u32 %s29, 1
        %s189 = smul.addr %s188, 16
        %s190 = scalar_lea.vmem [#allocation2], %s189
        %p191 = pneg %p42
        %p192 = pneg %p39
        %p193 = pneg %p63
        %p194 = pneg %p60
        %p195 = pneg %p84
        %p196 = pneg %p81
        %p197 = pneg %p110
        %p198 = pneg %p107
        %s199 = sand.u32 %s97, 1
        %s200 = scalar_lea.sflag [#allocation4], %s199
        %s201 = sand.u32 %s97, 1
        %s202 = smul.addr %s201, 16
        %s203 = scalar_lea.vmem [#allocation7], %s202
        %v205 = vld [vmem:[%s177] sm:$0xff]
        %v206 = vld [vmem:[%s177 + $0x8] sm:$0xff]
        %v207 = vpack.c.bf16 %v206, %v205
        %v208 = vld [vmem:[#allocation5] sm:$0xff]
        %v209 = vld [vmem:[#allocation5 + $0x8] sm:$0xf]
        %v210 = vld [vmem:[#allocation5 + $0xc] sm:$0xff]
        %v211 = vld [vmem:[#allocation5 + $0x14] sm:$0xf]
        %v212 = vld [vmem:[#allocation5 + $0x18] sm:$0xff]
        %v213 = vld [vmem:[#allocation5 + $0x20] sm:$0xf]
        %v214 = vld [vmem:[#allocation5 + $0x24] sm:$0xff]
        %v215 = vld [vmem:[#allocation5 + $0x2c] sm:$0xf]
        %v216 = vld [vmem:[#allocation5 + $0x30] sm:$0xff]
        %v217 = vld [vmem:[#allocation5 + $0x38] sm:$0xf]
        %v218 = vld [vmem:[#allocation5 + $0x3c] sm:$0xff]
        %v219 = vld [vmem:[#allocation5 + $0x44] sm:$0xf]
        %v220 = vld [vmem:[#allocation5 + $0x48] sm:$0xff]
        %v221 = vld [vmem:[#allocation5 + $0x50] sm:$0xf]
        %v222 = vld [vmem:[#allocation5 + $0x54] sm:$0xff]
        %v223 = vld [vmem:[#allocation5 + $0x5c] sm:$0xf]
        %v224 = vld [vmem:[#allocation5 + $0x60] sm:$0xff]
        %v225 = vld [vmem:[#allocation5 + $0x68] sm:$0xf]
        %v226 = vld [vmem:[#allocation5 + $0x6c] sm:$0xff]
        %v227 = vld [vmem:[#allocation5 + $0x74] sm:$0xf]
        %v228 = vld [vmem:[#allocation5 + $0x78] sm:$0xff]
        %v229 = vld [vmem:[#allocation5 + $0x80] sm:$0xf]
        %v230 = vld [vmem:[#allocation5 + $0x84] sm:$0xff]
        %v231 = vld [vmem:[#allocation5 + $0x8c] sm:$0xf]
        %v232 = vld [vmem:[#allocation5 + $0x90] sm:$0xff]
        %v233 = vld [vmem:[#allocation5 + $0x98] sm:$0xf]
        %v234 = vld [vmem:[#allocation5 + $0x9c] sm:$0xff]
        %v235 = vld [vmem:[#allocation5 + $0xa4] sm:$0xf]
        %v236 = vld [vmem:[#allocation5 + $0xa8] sm:$0xff]
        %v237 = vld [vmem:[#allocation5 + $0xb0] sm:$0xf]
        %v238 = vld [vmem:[#allocation5 + $0xb4] sm:$0xff]
        %v239 = vld [vmem:[#allocation5 + $0xbc] sm:$0xf]
        %v240 = vld [vmem:[%s2] sm:$0x7]
        %v242 = vlaneseq
        %v243 = vshrl.u32 %v242, 7
        %v244 = vsub.s32 0, %v243
        %v245 = vrot.slane %v240, %v244
        %v246 = vlaneseq
        %v247 = vshrl.u32 %v246, 7
        %v248 = vsub.s32 1, %v247
        %v249 = vrot.slane %v240, %v248
        %v250 = vlaneseq
        %v251 = vshrl.u32 %v250, 7
        %v252 = vsub.s32 2, %v251
        %v253 = vrot.slane %v240, %v252
        %v289 = vunpack.c.l.b16 %v208
        %v290 = vunpack.c.h.b16 %v208
        %v291 = vunpack.c.l.b16 %v209
        %v292 = vunpack.c.l.b16 %v210
        %v293 = vunpack.c.h.b16 %v210
        %v294 = vunpack.c.l.b16 %v211
        %v295 = vunpack.c.l.b16 %v212
        %v296 = vunpack.c.h.b16 %v212
        %v297 = vunpack.c.l.b16 %v213
        %v298 = vunpack.c.l.b16 %v214
        %v299 = vunpack.c.h.b16 %v214
        %v300 = vunpack.c.l.b16 %v215
        %v301 = vunpack.c.l.b16 %v216
        %v302 = vunpack.c.h.b16 %v216
        %v303 = vunpack.c.l.b16 %v217
        %v304 = vunpack.c.l.b16 %v218
        %v305 = vunpack.c.h.b16 %v218
        %v306 = vunpack.c.l.b16 %v219
        %v307 = vunpack.c.l.b16 %v220
        %v308 = vunpack.c.h.b16 %v220
        %v309 = vunpack.c.l.b16 %v221
        %v310 = vunpack.c.l.b16 %v222
        %v311 = vunpack.c.h.b16 %v222
        %v312 = vunpack.c.l.b16 %v223
        %v313 = vunpack.c.l.b16 %v224
        %v314 = vunpack.c.h.b16 %v224
        %v315 = vunpack.c.l.b16 %v225
        %v316 = vunpack.c.l.b16 %v226
        %v317 = vunpack.c.h.b16 %v226
        %v318 = vunpack.c.l.b16 %v227
        %v319 = vunpack.c.l.b16 %v228
        %v320 = vunpack.c.h.b16 %v228
        %v321 = vunpack.c.l.b16 %v229
        %v322 = vunpack.c.l.b16 %v230
        %v323 = vunpack.c.h.b16 %v230
        %v324 = vunpack.c.l.b16 %v231
        %v325 = vunpack.c.l.b16 %v232
        %v326 = vunpack.c.h.b16 %v232
        %v327 = vunpack.c.l.b16 %v233
        %v328 = vunpack.c.l.b16 %v234
        %v329 = vunpack.c.h.b16 %v234
        %v330 = vunpack.c.l.b16 %v235
        %v331 = vunpack.c.l.b16 %v236
        %v332 = vunpack.c.h.b16 %v236
        %v333 = vunpack.c.l.b16 %v237
        %v334 = vunpack.c.l.b16 %v238
        %v335 = vunpack.c.h.b16 %v238
        %v336 = vunpack.c.l.b16 %v239
        %v337 = vpack.c.b16 %v292, %v289
        %v338 = vpack.c.b16 %v293, %v290
        %v339 = vpack.c.b16 %v294, %v291
        %v340 = vpack.c.b16 %v298, %v295
        %v341 = vpack.c.b16 %v299, %v296
        %v342 = vpack.c.b16 %v300, %v297
        %v343 = vpack.c.b16 %v304, %v301
        %v344 = vpack.c.b16 %v305, %v302
        %v345 = vpack.c.b16 %v306, %v303
        %v346 = vpack.c.b16 %v310, %v307
        %v347 = vpack.c.b16 %v311, %v308
        %v348 = vpack.c.b16 %v312, %v309
        %v349 = vpack.c.b16 %v316, %v313
        %v350 = vpack.c.b16 %v317, %v314
        %v351 = vpack.c.b16 %v318, %v315
        %v352 = vpack.c.b16 %v322, %v319
        %v353 = vpack.c.b16 %v323, %v320
        %v354 = vpack.c.b16 %v324, %v321
        %v355 = vpack.c.b16 %v328, %v325
        %v356 = vpack.c.b16 %v329, %v326
        %v357 = vpack.c.b16 %v330, %v327
        %v358 = vpack.c.b16 %v334, %v331
        %v359 = vpack.c.b16 %v335, %v332
        %v360 = vpack.c.b16 %v336, %v333
        %385 = vmatprep.subr.bf16.mxu0 %v338
        %386 = vmatpush1.bf16.msra.mxu0 %v337
        %387 = vmatprep.subr.bf16.mxu0 %v341
        %388 = vmatpush1.bf16.msra.mxu0 %v340
        %389 = vmatprep.subr.bf16.mxu0 %v344
        %390 = vmatpush1.bf16.msra.mxu0 %v343
        %391 = vmatprep.subr.bf16.mxu0 %v347
        %392 = vmatpush1.bf16.msra.mxu0 %v346
        %393 = vmatprep.subr.bf16.mxu0 %v350
        %394 = vmatpush1.bf16.msra.mxu0 %v349
        %395 = vmatprep.subr.bf16.mxu0 %v353
        %396 = vmatpush1.bf16.msra.mxu0 %v352
        %397 = vmatprep.subr.bf16.mxu0 %v356
        %398 = vmatpush1.bf16.msra.mxu0 %v355
        %399 = vmatprep.subr.bf16.mxu0 %v359
        %400 = vmatpush1.bf16.msra.mxu0 %v358
        %401 = vmatprep.subr.bf16.mxu0 0
        %402 = vmatpush1.bf16.msra.mxu0 0
        %403 = vmatprep.subr.bf16.mxu0 0
        %404 = vmatpush1.bf16.msra.mxu0 0
        %405 = vmatprep.subr.bf16.mxu0 0
        %406 = vmatpush1.bf16.msra.mxu0 0
        %407 = vmatprep.subr.bf16.mxu0 0
        %408 = vmatpush1.bf16.msra.mxu0 0
        %409 = vmatprep.subr.bf16.mxu0 0
        %410 = vmatpush1.bf16.msra.mxu0 0
        %411 = vmatprep.subr.bf16.mxu0 0
        %412 = vmatpush1.bf16.msra.mxu0 0
        %413 = vmatprep.subr.bf16.mxu0 0
        %414 = vmatpush1.bf16.msra.mxu0 0
        %415 = vmatprep.subr.bf16.mxu0 0
        %416 = vmatpush1.bf16.msra.mxu0 0
        %417 = vmatprep.mubr.bf16.mxu0 0
        %418 = vmatmul.mubr.bf16.gmra.mrb[0].mxu0 %v207
        %v419 = vpop.f32.mrb[0].mxu0
        %v420 = vadd.f32 %v245, %v419
        %v421 = vpop.f32.mrb[0].mxu0
        %v422 = vadd.f32 %v249, %v421
        %v423 = vpop.f32.mrb[0].mxu0
        %v424 = vadd.f32 %v245, %v423
        %v425 = vpop.f32.mrb[0].mxu0
        %v426 = vadd.f32 %v249, %v425
        %427 = vdwg.mxu0
        %428 = vmatprep.subr.bf16.mxu0 0
        %429 = vmatpush1.bf16.msra.mxu0 %v339
        %430 = vmatprep.subr.bf16.mxu0 0
        %431 = vmatpush1.bf16.msra.mxu0 %v342
        %432 = vmatprep.subr.bf16.mxu0 0
        %433 = vmatpush1.bf16.msra.mxu0 %v345
        %434 = vmatprep.subr.bf16.mxu0 0
        %435 = vmatpush1.bf16.msra.mxu0 %v348
        %436 = vmatprep.subr.bf16.mxu0 0
        %437 = vmatpush1.bf16.msra.mxu0 %v351
        %438 = vmatprep.subr.bf16.mxu0 0
        %439 = vmatpush1.bf16.msra.mxu0 %v354
        %440 = vmatprep.subr.bf16.mxu0 0
        %441 = vmatpush1.bf16.msra.mxu0 %v357
        %442 = vmatprep.subr.bf16.mxu0 0
        %443 = vmatpush1.bf16.msra.mxu0 %v360
        %444 = vmatprep.subr.bf16.mxu0 0
        %445 = vmatpush1.bf16.msra.mxu0 0
        %446 = vmatprep.subr.bf16.mxu0 0
        %447 = vmatpush1.bf16.msra.mxu0 0
        %448 = vmatprep.subr.bf16.mxu0 0
        %449 = vmatpush1.bf16.msra.mxu0 0
        %450 = vmatprep.subr.bf16.mxu0 0
        %451 = vmatpush1.bf16.msra.mxu0 0
        %452 = vmatprep.subr.bf16.mxu0 0
        %453 = vmatpush1.bf16.msra.mxu0 0
        %454 = vmatprep.subr.bf16.mxu0 0
        %455 = vmatpush1.bf16.msra.mxu0 0
        %456 = vmatprep.subr.bf16.mxu0 0
        %457 = vmatpush1.bf16.msra.mxu0 0
        %458 = vmatprep.subr.bf16.mxu0 0
        %459 = vmatpush1.bf16.msra.mxu0 0
        %460 = vmatprep.mubr.bf16.mxu0 0
        %461 = vmatmul.mubr.bf16.gmra.mrb[0].mxu0 %v207
        %v462 = vpop.f32.mrb[0].mxu0
        %v463 = vadd.f32 %v253, %v462
        %v464 = vpop.f32.mrb[0].mxu0
        %v465 = vpop.f32.mrb[0].mxu0
        %v466 = vadd.f32 %v253, %v465
        %v467 = vpop.f32.mrb[0].mxu0
        %468 = vdwg.mxu0
        %v469 = vpack.c.bf16 %v424, %v420
        %v470 = vpack.c.bf16 %v426, %v422
        %v471 = vpack.c.bf16 %v466, %v463
        %vm472 = vcmask 261120
        %v474 = vsel %vm472, %v469, 0
        %v477 = vsel %vm472, %v470, 0
        %479 = vmatprep.subr.bf16.mxu0 0
        %480 = vmatpush1.bf16.xpose.msra.mxu0 %v477
        %481 = vmatprep.subr.bf16.mxu0 0
        %482 = vmatpush1.bf16.xpose.msra.mxu0 0
        %483 = vmatprep.subr.bf16.mxu0 0
        %484 = vmatpush1.bf16.xpose.msra.mxu0 0
        %485 = vmatprep.subr.bf16.mxu0 0
        %486 = vmatpush1.bf16.xpose.msra.mxu0 0
        %487 = vmatprep.subr.bf16.mxu0 0
        %488 = vmatpush1.bf16.xpose.msra.mxu0 0
        %489 = vmatprep.subr.bf16.mxu0 0
        %490 = vmatpush1.bf16.xpose.msra.mxu0 0
        %491 = vmatprep.subr.bf16.mxu0 0
        %492 = vmatpush1.bf16.xpose.msra.mxu0 0
        %493 = vmatprep.subr.bf16.mxu0 0
        %494 = vmatpush1.bf16.xpose.msra.mxu0 0
        %495 = vmatprep.subr.bf16.mxu0 0
        %496 = vmatpush1.bf16.xpose.msra.mxu0 0
        %497 = vmatprep.subr.bf16.mxu0 0
        %498 = vmatpush1.bf16.xpose.msra.mxu0 0
        %499 = vmatprep.subr.bf16.mxu0 0
        %500 = vmatpush1.bf16.xpose.msra.mxu0 0
        %501 = vmatprep.subr.bf16.mxu0 0
        %502 = vmatpush1.bf16.xpose.msra.mxu0 0
        %503 = vmatprep.subr.bf16.mxu0 0
        %504 = vmatpush1.bf16.xpose.msra.mxu0 0
        %505 = vmatprep.subr.bf16.mxu0 0
        %506 = vmatpush1.bf16.xpose.msra.mxu0 0
        %507 = vmatprep.subr.bf16.mxu0 0
        %508 = vmatpush1.bf16.xpose.msra.mxu0 0
        %509 = vmatprep.subr.bf16.mxu0 0
        %510 = vmatpush1.bf16.xpose.msra.mxu0 0
        %511 = vmatprep.mubr.bf16.mxu0 0
        %512 = vmatmul.mubr.bf16.gmra.mrb[0].mxu0 %v474
        %v513 = vpop.f32.mrb[0].mxu0
        %v514 = vadd.f32 0.0, %v513
        %v515 = vpop.f32.mrb[0].mxu0
        %v516 = vpop.f32.mrb[0].mxu0
        %v517 = vadd.f32 0.0, %v516
        %v518 = vpop.f32.mrb[0].mxu0
        %519 = vdwg.mxu0
        %vm520 = vcmask 130048
        %v521 = vsel %vm520, %v514, -inf
        %522 = vmax.xlane.f32.xlu0 %v521
        %v523 = vpop.xlane.xlu0 %522
        %v524 = vsel %vm520, %v517, -inf
        %525 = vmax.xlane.f32.xlu0 %v524
        %v526 = vpop.xlane.xlu0 %525
        %v527 = vsub.f32 %v514, %v523
        %v528 = vsub.f32 %v517, %v526
        %v529 = vmul.f32 %v527, 1.442695
        %v530 = vpow.pop %v529
        %v531 = vmul.f32 %v528, 1.442695
        %v532 = vpow.pop %v531
        %v533 = vsel %vm520, %v530, 0.0
        %534 = vadd.xlane.f32.xlu0 %v533
        %v535 = vpop.xlane.xlu0 %534
        %v536 = vsel %vm520, %v532, 0.0
        %537 = vadd.xlane.f32.xlu0 %v536
        %v538 = vpop.xlane.xlu0 %537
        %v539 = vrcp.pop %v535
        %v540 = vrcp.pop %v538
        %v541 = vmul.f32 %v530, %v539
        %v542 = vmul.f32 %v532, %v540
        %v543 = vpack.c.bf16 %v542, %v541
        %v545 = vsel %vm520, %v543, 0
        %547 = vmatprep.subr.bf16.mxu0 0
        %548 = vmatpush1.bf16.msra.mxu0 %v471
        %549 = vmatprep.subr.bf16.mxu0 0
        %550 = vmatpush1.bf16.msra.mxu0 0
        %551 = vmatprep.subr.bf16.mxu0 0
        %552 = vmatpush1.bf16.msra.mxu0 0
        %553 = vmatprep.subr.bf16.mxu0 0
        %554 = vmatpush1.bf16.msra.mxu0 0
        %555 = vmatprep.subr.bf16.mxu0 0
        %556 = vmatpush1.bf16.msra.mxu0 0
        %557 = vmatprep.subr.bf16.mxu0 0
        %558 = vmatpush1.bf16.msra.mxu0 0
        %559 = vmatprep.subr.bf16.mxu0 0
        %560 = vmatpush1.bf16.msra.mxu0 0
        %561 = vmatprep.subr.bf16.mxu0 0
        %562 = vmatpush1.bf16.msra.mxu0 0
        %563 = vmatprep.subr.bf16.mxu0 0
        %564 = vmatpush1.bf16.msra.mxu0 0
        %565 = vmatprep.subr.bf16.mxu0 0
        %566 = vmatpush1.bf16.msra.mxu0 0
        %567 = vmatprep.subr.bf16.mxu0 0
        %568 = vmatpush1.bf16.msra.mxu0 0
        %569 = vmatprep.subr.bf16.mxu0 0
        %570 = vmatpush1.bf16.msra.mxu0 0
        %571 = vmatprep.subr.bf16.mxu0 0
        %572 = vmatpush1.bf16.msra.mxu0 0
        %573 = vmatprep.subr.bf16.mxu0 0
        %574 = vmatpush1.bf16.msra.mxu0 0
        %575 = vmatprep.subr.bf16.mxu0 0
        %576 = vmatpush1.bf16.msra.mxu0 0
        %577 = vmatprep.subr.bf16.mxu0 0
        %578 = vmatpush1.bf16.msra.mxu0 0
        %579 = vmatprep.mubr.bf16.mxu0 0
        %580 = vmatmul.mubr.bf16.gmra.mrb[0].mxu0 %v545
        %v581 = vpop.f32.mrb[0].mxu0
        %v582 = vadd.f32 0.0, %v581
        %v583 = vpop.f32.mrb[0].mxu0
        %v584 = vpop.f32.mrb[0].mxu0
        %v585 = vadd.f32 0.0, %v584
        %v586 = vpop.f32.mrb[0].mxu0
        %587 = vdwg.mxu0
        %589 = vrot.lane.b32.xlu0 %v469, 96
        %v590 = vpop.permute.xlu0 %589
        %592 = vrot.lane.b32.xlu0 %v470, 96
        %v593 = vpop.permute.xlu0 %592
        %v595 = vsel %vm472, %v590, 0
        %v598 = vsel %vm472, %v593, 0
        %600 = vmatprep.subr.bf16.mxu0 0
        %601 = vmatpush1.bf16.xpose.msra.mxu0 %v598
        %602 = vmatprep.subr.bf16.mxu0 0
        %603 = vmatpush1.bf16.xpose.msra.mxu0 0
        %604 = vmatprep.subr.bf16.mxu0 0
        %605 = vmatpush1.bf16.xpose.msra.mxu0 0
        %606 = vmatprep.subr.bf16.mxu0 0
        %607 = vmatpush1.bf16.xpose.msra.mxu0 0
        %608 = vmatprep.subr.bf16.mxu0 0
        %609 = vmatpush1.bf16.xpose.msra.mxu0 0
        %610 = vmatprep.subr.bf16.mxu0 0
        %611 = vmatpush1.bf16.xpose.msra.mxu0 0
        %612 = vmatprep.subr.bf16.mxu0 0
        %613 = vmatpush1.bf16.xpose.msra.mxu0 0
        %614 = vmatprep.subr.bf16.mxu0 0
        %615 = vmatpush1.bf16.xpose.msra.mxu0 0
        %616 = vmatprep.subr.bf16.mxu0 0
        %617 = vmatpush1.bf16.xpose.msra.mxu0 0
        %618 = vmatprep.subr.bf16.mxu0 0
        %619 = vmatpush1.bf16.xpose.msra.mxu0 0
        %620 = vmatprep.subr.bf16.mxu0 0
        %621 = vmatpush1.bf16.xpose.msra.mxu0 0
        %622 = vmatprep.subr.bf16.mxu0 0
        %623 = vmatpush1.bf16.xpose.msra.mxu0 0
        %624 = vmatprep.subr.bf16.mxu0 0
        %625 = vmatpush1.bf16.xpose.msra.mxu0 0
        %626 = vmatprep.subr.bf16.mxu0 0
        %627 = vmatpush1.bf16.xpose.msra.mxu0 0
        %628 = vmatprep.subr.bf16.mxu0 0
        %629 = vmatpush1.bf16.xpose.msra.mxu0 0
        %630 = vmatprep.subr.bf16.mxu0 0
        %631 = vmatpush1.bf16.xpose.msra.mxu0 0
        %632 = vmatprep.mubr.bf16.mxu0 0
        %633 = vmatmul.mubr.bf16.gmra.mrb[0].mxu0 %v595
        %v634 = vpop.f32.mrb[0].mxu0
        %v635 = vadd.f32 0.0, %v634
        %v636 = vpop.f32.mrb[0].mxu0
        %v637 = vpop.f32.mrb[0].mxu0
        %v638 = vadd.f32 0.0, %v637
        %v639 = vpop.f32.mrb[0].mxu0
        %640 = vdwg.mxu0
        %v641 = vsel %vm520, %v635, -inf
        %642 = vmax.xlane.f32.xlu0 %v641
        %v643 = vpop.xlane.xlu0 %642
        %v644 = vsel %vm520, %v638, -inf
        %645 = vmax.xlane.f32.xlu0 %v644
        %v646 = vpop.xlane.xlu0 %645
        %v647 = vsub.f32 %v635, %v643
        %v648 = vsub.f32 %v638, %v646
        %v649 = vmul.f32 %v647, 1.442695
        %v650 = vpow.pop %v649
        %v651 = vmul.f32 %v648, 1.442695
        %v652 = vpow.pop %v651
        %v653 = vsel %vm520, %v650, 0.0
        %654 = vadd.xlane.f32.xlu0 %v653
        %v655 = vpop.xlane.xlu0 %654
        %v656 = vsel %vm520, %v652, 0.0
        %657 = vadd.xlane.f32.xlu0 %v656
        %v658 = vpop.xlane.xlu0 %657
        %v659 = vrcp.pop %v655
        %v660 = vrcp.pop %v658
        %v661 = vmul.f32 %v650, %v659
        %v662 = vmul.f32 %v652, %v660
        %v663 = vpack.c.bf16 %v662, %v661
        %665 = vrot.lane.b32.xlu0 %v471, 96
        %v666 = vpop.permute.xlu0 %665
        %v669 = vsel %vm520, %v663, 0
        %671 = vmatprep.subr.bf16.mxu0 0
        %672 = vmatpush1.bf16.msra.mxu0 %v666
        %673 = vmatprep.subr.bf16.mxu0 0
        %674 = vmatpush1.bf16.msra.mxu0 0
        %675 = vmatprep.subr.bf16.mxu0 0
        %676 = vmatpush1.bf16.msra.mxu0 0
        %677 = vmatprep.subr.bf16.mxu0 0
        %678 = vmatpush1.bf16.msra.mxu0 0
        %679 = vmatprep.subr.bf16.mxu0 0
        %680 = vmatpush1.bf16.msra.mxu0 0
        %681 = vmatprep.subr.bf16.mxu0 0
        %682 = vmatpush1.bf16.msra.mxu0 0
        %683 = vmatprep.subr.bf16.mxu0 0
        %684 = vmatpush1.bf16.msra.mxu0 0
        %685 = vmatprep.subr.bf16.mxu0 0
        %686 = vmatpush1.bf16.msra.mxu0 0
        %687 = vmatprep.subr.bf16.mxu0 0
        %688 = vmatpush1.bf16.msra.mxu0 0
        %689 = vmatprep.subr.bf16.mxu0 0
        %690 = vmatpush1.bf16.msra.mxu0 0
        %691 = vmatprep.subr.bf16.mxu0 0
        %692 = vmatpush1.bf16.msra.mxu0 0
        %693 = vmatprep.subr.bf16.mxu0 0
        %694 = vmatpush1.bf16.msra.mxu0 0
        %695 = vmatprep.subr.bf16.mxu0 0
        %696 = vmatpush1.bf16.msra.mxu0 0
        %697 = vmatprep.subr.bf16.mxu0 0
        %698 = vmatpush1.bf16.msra.mxu0 0
        %699 = vmatprep.subr.bf16.mxu0 0
        %700 = vmatpush1.bf16.msra.mxu0 0
        %701 = vmatprep.subr.bf16.mxu0 0
        %702 = vmatpush1.bf16.msra.mxu0 0
        %703 = vmatprep.mubr.bf16.mxu0 0
        %704 = vmatmul.mubr.bf16.gmra.mrb[0].mxu0 %v669
        %v705 = vpop.f32.mrb[0].mxu0
        %v706 = vadd.f32 0.0, %v705
        %v707 = vpop.f32.mrb[0].mxu0
        %v708 = vpop.f32.mrb[0].mxu0
        %v709 = vadd.f32 0.0, %v708
        %v710 = vpop.f32.mrb[0].mxu0
        %711 = vdwg.mxu0
        %712 = vrot.lane.b32.xlu0 %v469, 64
        %v713 = vpop.permute.xlu0 %712
        %714 = vrot.lane.b32.xlu0 %v470, 64
        %v715 = vpop.permute.xlu0 %714
        %v717 = vsel %vm472, %v713, 0
        %v720 = vsel %vm472, %v715, 0
        %722 = vmatprep.subr.bf16.mxu0 0
        %723 = vmatpush1.bf16.xpose.msra.mxu0 %v720
        %724 = vmatprep.subr.bf16.mxu0 0
        %725 = vmatpush1.bf16.xpose.msra.mxu0 0
        %726 = vmatprep.subr.bf16.mxu0 0
        %727 = vmatpush1.bf16.xpose.msra.mxu0 0
        %728 = vmatprep.subr.bf16.mxu0 0
        %729 = vmatpush1.bf16.xpose.msra.mxu0 0
        %730 = vmatprep.subr.bf16.mxu0 0
        %731 = vmatpush1.bf16.xpose.msra.mxu0 0
        %732 = vmatprep.subr.bf16.mxu0 0
        %733 = vmatpush1.bf16.xpose.msra.mxu0 0
        %734 = vmatprep.subr.bf16.mxu0 0
        %735 = vmatpush1.bf16.xpose.msra.mxu0 0
        %736 = vmatprep.subr.bf16.mxu0 0
        %737 = vmatpush1.bf16.xpose.msra.mxu0 0
        %738 = vmatprep.subr.bf16.mxu0 0
        %739 = vmatpush1.bf16.xpose.msra.mxu0 0
        %740 = vmatprep.subr.bf16.mxu0 0
        %741 = vmatpush1.bf16.xpose.msra.mxu0 0
        %742 = vmatprep.subr.bf16.mxu0 0
        %743 = vmatpush1.bf16.xpose.msra.mxu0 0
        %744 = vmatprep.subr.bf16.mxu0 0
        %745 = vmatpush1.bf16.xpose.msra.mxu0 0
        %746 = vmatprep.subr.bf16.mxu0 0
        %747 = vmatpush1.bf16.xpose.msra.mxu0 0
        %748 = vmatprep.subr.bf16.mxu0 0
        %749 = vmatpush1.bf16.xpose.msra.mxu0 0
        %750 = vmatprep.subr.bf16.mxu0 0
        %751 = vmatpush1.bf16.xpose.msra.mxu0 0
        %752 = vmatprep.subr.bf16.mxu0 0
        %753 = vmatpush1.bf16.xpose.msra.mxu0 0
        %754 = vmatprep.mubr.bf16.mxu0 0
        %755 = vmatmul.mubr.bf16.gmra.mrb[0].mxu0 %v717
        %v756 = vpop.f32.mrb[0].mxu0
        %v757 = vadd.f32 0.0, %v756
        %v758 = vpop.f32.mrb[0].mxu0
        %v759 = vpop.f32.mrb[0].mxu0
        %v760 = vadd.f32 0.0, %v759
        %v761 = vpop.f32.mrb[0].mxu0
        %762 = vdwg.mxu0
        %v763 = vsel %vm520, %v757, -inf
        %764 = vmax.xlane.f32.xlu0 %v763
        %v765 = vpop.xlane.xlu0 %764
        %v766 = vsel %vm520, %v760, -inf
        %767 = vmax.xlane.f32.xlu0 %v766
        %v768 = vpop.xlane.xlu0 %767
        %v769 = vsub.f32 %v757, %v765
        %v770 = vsub.f32 %v760, %v768
        %v771 = vmul.f32 %v769, 1.442695
        %v772 = vpow.pop %v771
        %v773 = vmul.f32 %v770, 1.442695
        %v774 = vpow.pop %v773
        %v775 = vsel %vm520, %v772, 0.0
        %776 = vadd.xlane.f32.xlu0 %v775
        %v777 = vpop.xlane.xlu0 %776
        %v778 = vsel %vm520, %v774, 0.0
        %779 = vadd.xlane.f32.xlu0 %v778
        %v780 = vpop.xlane.xlu0 %779
        %v781 = vrcp.pop %v777
        %v782 = vrcp.pop %v780
        %v783 = vmul.f32 %v772, %v781
        %v784 = vmul.f32 %v774, %v782
        %v785 = vpack.c.bf16 %v784, %v783
        %786 = vrot.lane.b32.xlu0 %v471, 64
        %v787 = vpop.permute.xlu0 %786
        %v790 = vsel %vm520, %v785, 0
        %792 = vmatprep.subr.bf16.mxu0 0
        %793 = vmatpush1.bf16.msra.mxu0 %v787
        %794 = vmatprep.subr.bf16.mxu0 0
        %795 = vmatpush1.bf16.msra.mxu0 0
        %796 = vmatprep.subr.bf16.mxu0 0
        %797 = vmatpush1.bf16.msra.mxu0 0
        %798 = vmatprep.subr.bf16.mxu0 0
        %799 = vmatpush1.bf16.msra.mxu0 0
        %800 = vmatprep.subr.bf16.mxu0 0
        %801 = vmatpush1.bf16.msra.mxu0 0
        %802 = vmatprep.subr.bf16.mxu0 0
        %803 = vmatpush1.bf16.msra.mxu0 0
        %804 = vmatprep.subr.bf16.mxu0 0
        %805 = vmatpush1.bf16.msra.mxu0 0
        %806 = vmatprep.subr.bf16.mxu0 0
        %807 = vmatpush1.bf16.msra.mxu0 0
        %808 = vmatprep.subr.bf16.mxu0 0
        %809 = vmatpush1.bf16.msra.mxu0 0
        %810 = vmatprep.subr.bf16.mxu0 0
        %811 = vmatpush1.bf16.msra.mxu0 0
        %812 = vmatprep.subr.bf16.mxu0 0
        %813 = vmatpush1.bf16.msra.mxu0 0
        %814 = vmatprep.subr.bf16.mxu0 0
        %815 = vmatpush1.bf16.msra.mxu0 0
        %816 = vmatprep.subr.bf16.mxu0 0
        %817 = vmatpush1.bf16.msra.mxu0 0
        %818 = vmatprep.subr.bf16.mxu0 0
        %819 = vmatpush1.bf16.msra.mxu0 0
        %820 = vmatprep.subr.bf16.mxu0 0
        %821 = vmatpush1.bf16.msra.mxu0 0
        %822 = vmatprep.subr.bf16.mxu0 0
        %823 = vmatpush1.bf16.msra.mxu0 0
        %824 = vmatprep.mubr.bf16.mxu0 0
        %825 = vmatmul.mubr.bf16.gmra.mrb[0].mxu0 %v790
        %v826 = vpop.f32.mrb[0].mxu0
        %v827 = vadd.f32 0.0, %v826
        %v828 = vpop.f32.mrb[0].mxu0
        %v829 = vpop.f32.mrb[0].mxu0
        %v830 = vadd.f32 0.0, %v829
        %v831 = vpop.f32.mrb[0].mxu0
        %832 = vdwg.mxu0
        %833 = vrot.lane.b32.xlu0 %v469, 32
        %v834 = vpop.permute.xlu0 %833
        %835 = vrot.lane.b32.xlu0 %v470, 32
        %v836 = vpop.permute.xlu0 %835
        %v838 = vsel %vm472, %v834, 0
        %v841 = vsel %vm472, %v836, 0
        %843 = vmatprep.subr.bf16.mxu0 0
        %844 = vmatpush1.bf16.xpose.msra.mxu0 %v841
        %845 = vmatprep.subr.bf16.mxu0 0
        %846 = vmatpush1.bf16.xpose.msra.mxu0 0
        %847 = vmatprep.subr.bf16.mxu0 0
        %848 = vmatpush1.bf16.xpose.msra.mxu0 0
        %849 = vmatprep.subr.bf16.mxu0 0
        %850 = vmatpush1.bf16.xpose.msra.mxu0 0
        %851 = vmatprep.subr.bf16.mxu0 0
        %852 = vmatpush1.bf16.xpose.msra.mxu0 0
        %853 = vmatprep.subr.bf16.mxu0 0
        %854 = vmatpush1.bf16.xpose.msra.mxu0 0
        %855 = vmatprep.subr.bf16.mxu0 0
        %856 = vmatpush1.bf16.xpose.msra.mxu0 0
        %857 = vmatprep.subr.bf16.mxu0 0
        %858 = vmatpush1.bf16.xpose.msra.mxu0 0
        %859 = vmatprep.subr.bf16.mxu0 0
        %860 = vmatpush1.bf16.xpose.msra.mxu0 0
        %861 = vmatprep.subr.bf16.mxu0 0
        %862 = vmatpush1.bf16.xpose.msra.mxu0 0
        %863 = vmatprep.subr.bf16.mxu0 0
        %864 = vmatpush1.bf16.xpose.msra.mxu0 0
        %865 = vmatprep.subr.bf16.mxu0 0
        %866 = vmatpush1.bf16.xpose.msra.mxu0 0
        %867 = vmatprep.subr.bf16.mxu0 0
        %868 = vmatpush1.bf16.xpose.msra.mxu0 0
        %869 = vmatprep.subr.bf16.mxu0 0
        %870 = vmatpush1.bf16.xpose.msra.mxu0 0
        %871 = vmatprep.subr.bf16.mxu0 0
        %872 = vmatpush1.bf16.xpose.msra.mxu0 0
        %873 = vmatprep.subr.bf16.mxu0 0
        %874 = vmatpush1.bf16.xpose.msra.mxu0 0
        %875 = vmatprep.mubr.bf16.mxu0 0
        %876 = vmatmul.mubr.bf16.gmra.mrb[0].mxu0 %v838
        %v877 = vpop.f32.mrb[0].mxu0
        %v878 = vadd.f32 0.0, %v877
        %v879 = vpop.f32.mrb[0].mxu0
        %v880 = vpop.f32.mrb[0].mxu0
        %v881 = vadd.f32 0.0, %v880
        %v882 = vpop.f32.mrb[0].mxu0
        %883 = vdwg.mxu0
        %v884 = vsel %vm520, %v878, -inf
        %885 = vmax.xlane.f32.xlu0 %v884
        %v886 = vpop.xlane.xlu0 %885
        %v887 = vsel %vm520, %v881, -inf
        %888 = vmax.xlane.f32.xlu0 %v887
        %v889 = vpop.xlane.xlu0 %888
        %v890 = vsub.f32 %v878, %v886
        %v891 = vsub.f32 %v881, %v889
        %v892 = vmul.f32 %v890, 1.442695
        %v893 = vpow.pop %v892
        %v894 = vmul.f32 %v891, 1.442695
        %v895 = vpow.pop %v894
        %v896 = vsel %vm520, %v893, 0.0
        %897 = vadd.xlane.f32.xlu0 %v896
        %v898 = vpop.xlane.xlu0 %897
        %v899 = vsel %vm520, %v895, 0.0
        %900 = vadd.xlane.f32.xlu0 %v899
        %v901 = vpop.xlane.xlu0 %900
        %v902 = vrcp.pop %v898
        %v903 = vrcp.pop %v901
        %v904 = vmul.f32 %v893, %v902
        %v905 = vmul.f32 %v895, %v903
        %v906 = vpack.c.bf16 %v905, %v904
        %907 = vrot.lane.b32.xlu0 %v471, 32
        %v908 = vpop.permute.xlu0 %907
        %v911 = vsel %vm520, %v906, 0
        %913 = vmatprep.subr.bf16.mxu0 0
        %914 = vmatpush1.bf16.msra.mxu0 %v908
        %915 = vmatprep.subr.bf16.mxu0 0
        %916 = vmatpush1.bf16.msra.mxu0 0
        %917 = vmatprep.subr.bf16.mxu0 0
        %918 = vmatpush1.bf16.msra.mxu0 0
        %919 = vmatprep.subr.bf16.mxu0 0
        %920 = vmatpush1.bf16.msra.mxu0 0
        %921 = vmatprep.subr.bf16.mxu0 0
        %922 = vmatpush1.bf16.msra.mxu0 0
        %923 = vmatprep.subr.bf16.mxu0 0
        %924 = vmatpush1.bf16.msra.mxu0 0
        %925 = vmatprep.subr.bf16.mxu0 0
        %926 = vmatpush1.bf16.msra.mxu0 0
        %927 = vmatprep.subr.bf16.mxu0 0
        %928 = vmatpush1.bf16.msra.mxu0 0
        %929 = vmatprep.subr.bf16.mxu0 0
        %930 = vmatpush1.bf16.msra.mxu0 0
        %931 = vmatprep.subr.bf16.mxu0 0
        %932 = vmatpush1.bf16.msra.mxu0 0
        %933 = vmatprep.subr.bf16.mxu0 0
        %934 = vmatpush1.bf16.msra.mxu0 0
        %935 = vmatprep.subr.bf16.mxu0 0
        %936 = vmatpush1.bf16.msra.mxu0 0
        %937 = vmatprep.subr.bf16.mxu0 0
        %938 = vmatpush1.bf16.msra.mxu0 0
        %939 = vmatprep.subr.bf16.mxu0 0
        %940 = vmatpush1.bf16.msra.mxu0 0
        %941 = vmatprep.subr.bf16.mxu0 0
        %942 = vmatpush1.bf16.msra.mxu0 0
        %943 = vmatprep.subr.bf16.mxu0 0
        %944 = vmatpush1.bf16.msra.mxu0 0
        %945 = vmatprep.mubr.bf16.mxu0 0
        %946 = vmatmul.mubr.bf16.gmra.mrb[0].mxu0 %v911
        %v947 = vpop.f32.mrb[0].mxu0
        %v948 = vadd.f32 0.0, %v947
        %v949 = vpop.f32.mrb[0].mxu0
        %v950 = vpop.f32.mrb[0].mxu0
        %v951 = vadd.f32 0.0, %v950
        %v952 = vpop.f32.mrb[0].mxu0
        %953 = vdwg.mxu0
        %956 = vrot.lane.b32.xlu0 %v706, 32
        %v957 = vpop.permute.xlu0 %956
        %958 = vrot.lane.b32.xlu0 %v709, 32
        %v959 = vpop.permute.xlu0 %958
        %964 = vrot.lane.b32.xlu0 %v827, 64
        %v965 = vpop.permute.xlu0 %964
        %966 = vrot.lane.b32.xlu0 %v830, 64
        %v967 = vpop.permute.xlu0 %966
        %972 = vrot.lane.b32.xlu0 %v948, 96
        %v973 = vpop.permute.xlu0 %972
        %974 = vrot.lane.b32.xlu0 %v951, 96
        %v975 = vpop.permute.xlu0 %974
        %v978 = vsel %vm472, %v582, %v957
        %v979 = vsel %vm472, %v585, %v959
        %vm980 = vcmask 523264
        %v981 = vsel %vm980, %v978, %v965
        %v982 = vsel %vm980, %v979, %v967
        %vm983 = vcmask 785408
        %v984 = vsel %vm983, %v981, %v973
        %v985 = vsel %vm983, %v982, %v975
        %986 = vst [vmem:[%s203] sm:$0xff] %v984
        %987 = vst [vmem:[%s203 + $0x8] sm:$0xff] %v985
        %s988 = sand.u32 %s97, 1
        %s989 = scalar_lea.sflag [#allocation4], %s988
        %s990 = sand.u32 %s97, 1
        %s991 = smul.addr %s990, 16
        %s992 = scalar_lea.vmem [#allocation7], %s991
        // Predicated region
        $region41: #{tpu_custom_call.1} parent=31 // pred_check
          %p993 = pneg %p107
        $region42: #{tpu_custom_call.1} parent=31 // pred_check_branch
          %995 = sbr.rel (%p993) target = $region44
        $region43: #{tpu_custom_call.1} parent=31 // pred_region
          %s997 = ssub.s32 256, 256
          %998 = vsyncadd %s989, %s997
          %s999 = smul.addr %s21, 2
          %s1000 = smul.addr %s999, 128
          %s1001 = scalar_lea.hbm %s3, %s1000
          %s1002 = sshll.u32 %s992, 4
          %s1003 = int_to_ptr.vmem [resolvable:$true] %s1002
          %1008 = dma.vmem_to_hbm [thread:$0]  %s1003, 256, %s1001, %s989, 128, 128, 8
        $region44: #{tpu_custom_call.1} parent=31 // pred_fallthru
          _
      $region32: #{tpu_custom_call.1} parent=5 // pred_fallthru
        _
      %p1009 = scmp.le.s32.totalorder 2, %s16
      // Predicated region
      $region45: #{tpu_custom_call.1} parent=5 // pred_check
        %p1010 = pneg %p1009
      $region46: #{tpu_custom_call.1} parent=5 // pred_check_branch
        %1012 = sbr.rel (%p1010) target = $region48
      $region47: #{tpu_custom_call.1} parent=5 // pred_region
        %s1013 = ssub.s32 %s16, 2
        // Predicated region
        $region49: #{tpu_custom_call.1} parent=47 // pred_check
          %p1014 = pneg %p113
        $region50: #{tpu_custom_call.1} parent=47 // pred_check_branch
          %1016 = sbr.rel (%p1014) target = $region52
        $region51: #{tpu_custom_call.1} parent=47 // pred_region
          %s1017 = sand.u32 %s98, 1
          %s1018 = scalar_lea.sflag [#allocation4], %s1017
          %s1019 = sand.u32 %s98, 1
          %s1020 = smul.addr %s1019, 16
          %s1021 = scalar_lea.vmem [#allocation7], %s1020
          %1022 = dma.done %s1018, 256
        $region52: #{tpu_custom_call.1} parent=47 // pred_fallthru
          _
      $region48: #{tpu_custom_call.1} parent=5 // pred_fallthru
        _
    $region6: #{tpu_custom_call.1} parent=1 // loop_footer
      %s20 = sadd.s32 1, %s16
    $region7: #{tpu_custom_call.1} parent=1 // loop_footer_branch
      %15 = sbr.rel target = $region3
    $region8: #{tpu_custom_call.1} parent=1 // loop_exit
      _
    %1023 = vsyncpa [#allocation3], 1
    %s1024 = scalar_lea.sflag [#allocation3], 1
    %1025 = vsyncpa %s1024, 1
    %1026 = vsyncpa [#allocation6], 1
    %1027 = vsyncpa [#allocation4], 1
    %s1028 = scalar_lea.sflag [#allocation4], 1
    %1029 = vsyncpa %s1028, 1

</llo_original>
